<compile_context>
chip_gen: v7x
topology: tpu7x:2x2x1
jax: 0.10.0
libtpu: 0.0.40
codegen_flags: <defaults>
</compile_context>

<pallas_src>
import jax
import jax.numpy as jnp
from jax import lax
from jax.experimental import pallas as pl
from jax.experimental.pallas import tpu as pltpu


def _round_up(x, m):
    return ((x + m - 1) // m) * m


def _pick_tk(b, d, itemsize):
    """Feature-tile size: largest 128-multiple whose double-buffered (B, TK)
    tiles stay well inside the smallest scoped-VMEM budget across TPU
    generations (16 MiB default v5e, 32 MiB v6e/v7x scoped, 64 MiB v7x phys)."""
    budget = 8 * 1024 * 1024                      # bytes for 2 x (B, TK) buffers
    tk = budget // max(1, 2 * b * itemsize)
    tk = max(128, (tk // 128) * 128)
    tk = min(tk, 2048)                            # per-step overhead amortized long before this
    tk = min(tk, _round_up(d, 128))
    return tk


# ----------------------------------------------------------------------------
# Fused kernel
# ----------------------------------------------------------------------------
def _np_loss_kernel(scale_ref, psd_ref, labc_ref, labr_ref, x_ref,
                    out_ref, acc_ref, sqi_ref, sqj_ref):
    k = pl.program_id(0)

    @pl.when(k == 0)
    def _():
        acc_ref[...] = jnp.zeros_like(acc_ref)
        sqi_ref[...] = jnp.zeros_like(sqi_ref)
        sqj_ref[...] = jnp.zeros_like(sqj_ref)

    # ---- per-tile accumulation ------------------------------------------------
    x = x_ref[...]                                   # (B, TK), native float dtype
    # One VMEM tile used as BOTH matmul operands (single DMA stream for self-Gram).
    acc_ref[...] += lax.dot_general(x, x, (((1,), (1,)), ((), ())),
                                    preferred_element_type=jnp.float32)
    xf = x.astype(jnp.float32)
    x2 = xf * xf
    sqi_ref[...] += jnp.sum(x2, axis=1, keepdims=True)                       # (B, 1)
    ones_row = jnp.ones((1, x2.shape[1]), dtype=jnp.float32)
    sqj_ref[...] += lax.dot_general(ones_row, x2, (((1,), (1,)), ((), ())),
                                    preferred_element_type=jnp.float32)      # (1, B)

    # ---- finalize on the last feature tile ------------------------------------
    @pl.when(k == pl.num_programs(0) - 1)
    def _():
        g = acc_ref[...]                              # (B, B) f32 Gram
        bsz = g.shape[0]
        row = lax.broadcasted_iota(jnp.int32, (bsz, bsz), 0)
        col = lax.broadcasted_iota(jnp.int32, (bsz, bsz), 1)
        diag = row == col

        d2 = sqi_ref[...] + sqj_ref[...] - 2.0 * g
        d = jnp.sqrt(jnp.maximum(d2, 0.0))

        # softmax over -d with the diagonal removed (== the PyTorch
        # flatten/view diagonal-drop trick), folded into a log-sum-exp:
        #   -log(probs_i) = log(sum_all e_ij) - log(sum_{match} e_ij)
        # NOTE: NaN for B == 1 and +inf if a sample has no same-label partner,
        # identical to the reference semantics.
        neg = jnp.where(diag, -jnp.inf, -d)
        m = jnp.max(neg, axis=1, keepdims=True)
        e = jnp.exp(neg - m)                          # diagonal -> exp(-inf) = 0
        denom = jnp.sum(e, axis=1, keepdims=True)
        match = (labc_ref[...] == labr_ref[...]) & jnp.logical_not(diag)
        num = jnp.sum(jnp.where(match, e, 0.0), axis=1, keepdims=True)
        dist_loss = jnp.sum(jnp.log(denom) - jnp.log(num)) / 200.0

        # PSD regularizer: psd_ref already holds |FFT2|^2, lane-dense (B, H*W).
        psd = psd_ref[...]
        avg = jnp.mean(psd, axis=0, keepdims=True)    # (1, H*W)
        khw = jnp.float32(avg.shape[1])
        psd_val = jnp.sum(jnp.log(avg)) / khw - jnp.log(jnp.sum(avg) / khw)
        psd_loss = scale_ref[0, 0] * jnp.clip(psd_val, 0.0, 100.0)

        out_ref[0, 0] = psd_loss + dist_loss


# ----------------------------------------------------------------------------
# Wrapper
# ----------------------------------------------------------------------------
def _psd_input(embeddings):
    """(B, 1, H, W) -> lane-dense (B, H*W) f32 array of |FFT2|^2 values."""
    b, c, h, w = embeddings.shape
    x = embeddings.reshape(b, h, w).astype(jnp.float32)
    dft = jnp.fft.fft2(x)
    # |DFT|^2 computed in XLA so it fuses with the FFT epilogue; a single
    # lane-dense array halves the HBM bytes DMA'd into the Pallas kernel.
    return (jnp.real(dft) ** 2 + jnp.imag(dft) ** 2).reshape(b, h * w)


def np_loss(embeddings, labels, lamda, psd_flag=True, epoch=1):
    """Forward pass of NP_Loss. embeddings: (B, C, H, W); labels: (B,) or (B, 1)."""
    b, c, h, w = embeddings.shape

    # Keep the embeddings in their native floating dtype (bf16 stays bf16 ->
    # half the HBM bytes); the (B, B) accumulator is always f32.
    emb = embeddings.reshape(b, -1)
    if not jnp.issubdtype(emb.dtype, jnp.floating):
        emb = emb.astype(jnp.float32)
    d = emb.shape[1]

    if psd_flag:
        if c != 1:
            raise ValueError("PSD path requires C == 1 (PyTorch squeeze() semantics).")
        psd = _psd_input(embeddings)
        scale = jnp.full((1, 1), -float(lamda) * epoch, dtype=jnp.float32)
    else:
        # Benign PSD input: log(1) = 0 everywhere and the scale is 0.
        psd = jnp.ones((b, h * w), dtype=jnp.float32)
        scale = jnp.zeros((1, 1), dtype=jnp.float32)
    hw = psd.shape[1]

    lab = labels.reshape(-1).astype(jnp.int32)
    labc = lab.reshape(b, 1)
    labr = lab.reshape(1, b)

    itemsize = emb.dtype.itemsize
    tk = _pick_tk(b, d, itemsize)
    d_pad = _round_up(d, tk)
    if d_pad != d:
        # zero padding: contributes nothing to the Gram or the squared norms.
        emb = jnp.pad(emb, ((0, 0), (0, d_pad - d)))
    kt = d_pad // tk

    grid_spec = pltpu.PrefetchScalarGridSpec(
        num_scalar_prefetch=0,
        grid=(kt,),
        in_specs=[
            pl.BlockSpec((1, 1), lambda k: (0, 0),
                         memory_space=pltpu.MemorySpace.SMEM),     # scale
            pl.BlockSpec((b, hw), lambda k: (0, 0)),               # psd (resident)
            pl.BlockSpec((b, 1), lambda k: (0, 0)),                # labels column
            pl.BlockSpec((1, b), lambda k: (0, 0)),                # labels row
            pl.BlockSpec((b, tk), lambda k: (0, k)),               # embedding K-tiles
        ],
        out_specs=pl.BlockSpec((1, 1), lambda k: (0, 0),
                               memory_space=pltpu.MemorySpace.SMEM),
        scratch_shapes=[
            pltpu.VMEM((b, b), jnp.float32),    # Gram accumulator
            pltpu.VMEM((b, 1), jnp.float32),    # squared norms (rows)
            pltpu.VMEM((1, b), jnp.float32),    # squared norms (cols)
        ],
    )

    cost = pl.CostEstimate(
        flops=int(2 * b * b * d_pad + 4 * b * d_pad + 4 * b * b),
        transcendentals=int(b * b + b * hw + 4 * b + 2),
        bytes_accessed=int(b * d_pad * itemsize + b * hw * 4 + 2 * b * 4 + 8),
    )

    out = pl.pallas_call(
        _np_loss_kernel,
        out_shape=jax.ShapeDtypeStruct((1, 1), jnp.float32),
        grid_spec=grid_spec,
        compiler_params=pltpu.CompilerParams(
            dimension_semantics=("arbitrary",),        # K axis is a reduction
            vmem_limit_bytes=32 * 1024 * 1024,         # explicit, fits all gens
        ),
        cost_estimate=cost,
    )(scale, psd, labc, labr, emb)
    return out[0, 0]


# ----------------------------------------------------------------------------
# Pure-JAX reference (mirrors the PyTorch forward) for a sanity check.
# ----------------------------------------------------------------------------
def _np_loss_ref(embeddings, labels, lamda, epoch=1):
    b, c, h, w = embeddings.shape
    x = embeddings.reshape(b, h, w)
    dft = jnp.fft.fft2(x)
    avg = jnp.mean(jnp.real(dft * jnp.conj(dft)), axis=0)
    k = h * w
    loss_psd = jnp.clip(jnp.sum(jnp.log(avg)) / k - jnp.log(jnp.sum(avg) / k),
                        0.0, 100.0)
    loss = -lamda * epoch * loss_psd

    e = embeddings.reshape(b, -1)
    d = jnp.sqrt(jnp.maximum(
        jnp.sum((e[:, None, :] - e[None, :, :]) ** 2, axis=-1), 0.0))
    off = ~jnp.eye(b, dtype=bool)
    sm = jax.nn.softmax(jnp.where(off, -d, -jnp.inf), axis=1)
    match = (labels[:, None] == labels[None, :]) & off
    probs = jnp.sum(jnp.where(match, sm, 0.0), axis=1)
    loss = loss + jnp.sum(-jnp.log(probs)) / 200.0
    return loss


if __name__ == "__main__":
    key = jax.random.PRNGKey(0)
    B, C, H, W = 8, 1, 16, 16
    embeddings = jax.random.normal(key, (B, C, H, W), dtype=jnp.float32)
    # labels (B, 1) like the PyTorch module (it calls .squeeze()); labels repeat
    labels = jnp.array([0, 0, 1, 1, 2, 2, 3, 3], dtype=jnp.int32).reshape(B, 1)
    lamda = 0.1

    out = np_loss(embeddings, labels, lamda, psd_flag=True, epoch=1)
    out = jax.block_until_ready(out)

    ref = jax.block_until_ready(_np_loss_ref(embeddings, labels.reshape(-1), lamda))
    assert bool(jnp.isfinite(out)), out
    assert abs(float(out) - float(ref)) <= 1e-2 * max(1.0, abs(float(ref))), (out, ref)
    print("KERNEL_OK")
</pallas_src>

<mosaic_0001>
module attributes {stable_mosaic.version = 11 : i64} {
  func.func @_np_loss_kernel(%arg0: i32, %arg1: memref<1x1xf32, #tpu.memory_space<smem>>, %arg2: memref<8x256xf32, #tpu.memory_space<vmem>>, %arg3: memref<8x1xi32, #tpu.memory_space<vmem>>, %arg4: memref<1x8xi32, #tpu.memory_space<vmem>>, %arg5: memref<8x256xf32, #tpu.memory_space<vmem>>, %arg6: memref<1x1xf32, #tpu.memory_space<smem>>, %arg7: memref<8x8xf32, #tpu.memory_space<vmem>>, %arg8: memref<8x1xf32, #tpu.memory_space<vmem>>, %arg9: memref<1x8xf32, #tpu.memory_space<vmem>>) attributes {dimension_semantics = [#tpu.dimension_semantics<arbitrary>], iteration_bounds = array<i64: 1>, scalar_prefetch = 0 : i64, scratch_operands = 3 : i64, tpu.core_type = #tpu.core_type<tc>, window_params = [{transform_indices = @transform_0, window_bounds = array<i64: 1, 1>}, {pipeline_mode = #tpu.pipeline_mode<synchronous>, transform_indices = @transform_1, window_bounds = array<i64: 8, 256>}, {pipeline_mode = #tpu.pipeline_mode<synchronous>, transform_indices = @transform_2, window_bounds = array<i64: 8, 1>}, {pipeline_mode = #tpu.pipeline_mode<synchronous>, transform_indices = @transform_3, window_bounds = array<i64: 1, 8>}, {transform_indices = @transform_4, window_bounds = array<i64: 8, 256>}, {transform_indices = @transform_5, window_bounds = array<i64: 1, 1>}]} {
    %c0_i32 = arith.constant 0 : i32
    %0 = arith.cmpi eq, %arg0, %c0_i32 : i32
    %1 = arith.extui %0 : i1 to i32
    %c0_i32_0 = arith.constant 0 : i32
    %2 = arith.cmpi ne, %1, %c0_i32_0 : i32
    scf.if %2 {
      %cst_19 = arith.constant 0.000000e+00 : f32
      %22 = vector.broadcast %cst_19 : f32 to vector<8x8xf32>
      %c0_20 = arith.constant 0 : index
      %c0_21 = arith.constant 0 : index
      %23 = vector.load %arg7[%c0_20, %c0_21] : memref<8x8xf32, #tpu.memory_space<vmem>>, vector<8x8xf32>
      tpu.vector_store %arg7[%c0_20, %c0_21], %22 {strides = array<i32>} : memref<8x8xf32, #tpu.memory_space<vmem>>, vector<8x8xf32>,
      %cst_22 = arith.constant 0.000000e+00 : f32
      %24 = vector.broadcast %cst_22 : f32 to vector<8x1xf32>
      %c0_23 = arith.constant 0 : index
      %c0_24 = arith.constant 0 : index
      %25 = vector.load %arg8[%c0_23, %c0_24] : memref<8x1xf32, #tpu.memory_space<vmem>>, vector<8x1xf32>
      tpu.vector_store %arg8[%c0_23, %c0_24], %24 {strides = array<i32>} : memref<8x1xf32, #tpu.memory_space<vmem>>, vector<8x1xf32>,
      %cst_25 = arith.constant 0.000000e+00 : f32
      %26 = vector.broadcast %cst_25 : f32 to vector<1x8xf32>
      %c0_26 = arith.constant 0 : index
      %c0_27 = arith.constant 0 : index
      %27 = vector.load %arg9[%c0_26, %c0_27] : memref<1x8xf32, #tpu.memory_space<vmem>>, vector<1x8xf32>
      tpu.vector_store %arg9[%c0_26, %c0_27], %26 {strides = array<i32>} : memref<1x8xf32, #tpu.memory_space<vmem>>, vector<1x8xf32>,
    } else {
    }
    %c0 = arith.constant 0 : index
    %c0_1 = arith.constant 0 : index
    %3 = vector.load %arg5[%c0, %c0_1] : memref<8x256xf32, #tpu.memory_space<vmem>>, vector<8x256xf32>
    %c0_2 = arith.constant 0 : index
    %c0_3 = arith.constant 0 : index
    %4 = vector.load %arg7[%c0_2, %c0_3] : memref<8x8xf32, #tpu.memory_space<vmem>>, vector<8x8xf32>
    %cst = arith.constant dense<0.000000e+00> : vector<8x8xf32>
    %5 = tpu.matmul %3, %3, %cst {dimension_numbers = #tpu.dot_dimension_numbers<[1], [1], [0], [0], [0, 0, 1, 0], [], []>} : vector<8x256xf32>, vector<8x256xf32>, vector<8x8xf32> -> vector<8x8xf32>
    %6 = arith.addf %4, %5 : vector<8x8xf32>
    %c0_4 = arith.constant 0 : index
    %c0_5 = arith.constant 0 : index
    %7 = vector.load %arg7[%c0_4, %c0_5] : memref<8x8xf32, #tpu.memory_space<vmem>>, vector<8x8xf32>
    tpu.vector_store %arg7[%c0_4, %c0_5], %6 {strides = array<i32>} : memref<8x8xf32, #tpu.memory_space<vmem>>, vector<8x8xf32>,
    %8 = arith.mulf %3, %3 : vector<8x256xf32>
    %c0_6 = arith.constant 0 : index
    %c0_7 = arith.constant 0 : index
    %9 = vector.load %arg8[%c0_6, %c0_7] : memref<8x1xf32, #tpu.memory_space<vmem>>, vector<8x1xf32>
    %cst_8 = arith.constant dense<0.000000e+00> : vector<8xf32>
    %10 = vector.multi_reduction <add>, %8, %cst_8 [1] : vector<8x256xf32> to vector<8xf32>
    %11 = vector.shape_cast %10 : vector<8xf32> to vector<8x1xf32>
    %12 = arith.addf %9, %11 : vector<8x1xf32>
    %c0_9 = arith.constant 0 : index
    %c0_10 = arith.constant 0 : index
    %13 = vector.load %arg8[%c0_9, %c0_10] : memref<8x1xf32, #tpu.memory_space<vmem>>, vector<8x1xf32>
    tpu.vector_store %arg8[%c0_9, %c0_10], %12 {strides = array<i32>} : memref<8x1xf32, #tpu.memory_space<vmem>>, vector<8x1xf32>,
    %cst_11 = arith.constant 1.000000e+00 : f32
    %14 = vector.broadcast %cst_11 : f32 to vector<1x256xf32>
    %c0_12 = arith.constant 0 : index
    %c0_13 = arith.constant 0 : index
    %15 = vector.load %arg9[%c0_12, %c0_13] : memref<1x8xf32, #tpu.memory_space<vmem>>, vector<1x8xf32>
    %cst_14 = arith.constant dense<0.000000e+00> : vector<1x8xf32>
    %16 = tpu.matmul %14, %8, %cst_14 {dimension_numbers = #tpu.dot_dimension_numbers<[1], [1], [0], [0], [0, 0, 1, 0], [], []>} : vector<1x256xf32>, vector<8x256xf32>, vector<1x8xf32> -> vector<1x8xf32>
    %17 = arith.addf %15, %16 : vector<1x8xf32>
    %c0_15 = arith.constant 0 : index
    %c0_16 = arith.constant 0 : index
    %18 = vector.load %arg9[%c0_15, %c0_16] : memref<1x8xf32, #tpu.memory_space<vmem>>, vector<1x8xf32>
    tpu.vector_store %arg9[%c0_15, %c0_16], %17 {strides = array<i32>} : memref<1x8xf32, #tpu.memory_space<vmem>>, vector<1x8xf32>,
    %c0_i32_17 = arith.constant 0 : i32
    %19 = arith.cmpi eq, %arg0, %c0_i32_17 : i32
    %20 = arith.extui %19 : i1 to i32
    %c0_i32_18 = arith.constant 0 : i32
    %21 = arith.cmpi ne, %20, %c0_i32_18 : i32
    scf.if %21 {
      %c0_19 = arith.constant 0 : index
      %c0_20 = arith.constant 0 : index
      %22 = vector.load %arg7[%c0_19, %c0_20] : memref<8x8xf32, #tpu.memory_space<vmem>>, vector<8x8xf32>
      %23 = tpu.iota {dimensions = array<i32: 0>} : vector<8x8xi32>
      %24 = tpu.iota {dimensions = array<i32: 1>} : vector<8x8xi32>
      %25 = arith.cmpi eq, %23, %24 : vector<8x8xi32>
      %c0_21 = arith.constant 0 : index
      %c0_22 = arith.constant 0 : index
      %26 = vector.load %arg8[%c0_21, %c0_22] : memref<8x1xf32, #tpu.memory_space<vmem>>, vector<8x1xf32>
      %c0_23 = arith.constant 0 : index
      %c0_24 = arith.constant 0 : index
      %27 = vector.load %arg9[%c0_23, %c0_24] : memref<1x8xf32, #tpu.memory_space<vmem>>, vector<1x8xf32>
      %28 = vector.broadcast %26 : vector<8x1xf32> to vector<8x8xf32>
      %29 = vector.broadcast %27 : vector<1x8xf32> to vector<8x8xf32>
      %30 = arith.addf %28, %29 : vector<8x8xf32>
      %cst_25 = arith.constant 2.000000e+00 : f32
      %31 = vector.broadcast %cst_25 : f32 to vector<8x8xf32>
      %32 = arith.mulf %31, %22 : vector<8x8xf32>
      %33 = arith.subf %30, %32 : vector<8x8xf32>
      %cst_26 = arith.constant 0.000000e+00 : f32
      %34 = vector.broadcast %cst_26 : f32 to vector<8x8xf32>
      %35 = arith.maximumf %33, %34 : vector<8x8xf32>
      %36 = math.sqrt %35 : vector<8x8xf32>
      %cst_27 = arith.constant 0.000000e+00 : f32
      %37 = vector.broadcast %cst_27 : f32 to vector<8x8xf32>
      %38 = arith.subf %37, %36 : vector<8x8xf32>
      %cst_28 = arith.constant 0xFF800000 : f32
      %39 = vector.broadcast %cst_28 : f32 to vector<8x8xf32>
      %40 = arith.select %25, %39, %38 : vector<8x8xi1>, vector<8x8xf32>
      %cst_29 = arith.constant dense<0xFF800000> : vector<8xf32>
      %41 = vector.multi_reduction <maximumf>, %40, %cst_29 [1] : vector<8x8xf32> to vector<8xf32>
      %42 = vector.shape_cast %41 : vector<8xf32> to vector<8x1xf32>
      %43 = vector.broadcast %42 : vector<8x1xf32> to vector<8x8xf32>
      %44 = arith.subf %40, %43 : vector<8x8xf32>
      %45 = math.exp %44 : vector<8x8xf32>
      %cst_30 = arith.constant dense<0.000000e+00> : vector<8xf32>
      %46 = vector.multi_reduction <add>, %45, %cst_30 [1] : vector<8x8xf32> to vector<8xf32>
      %47 = vector.shape_cast %46 : vector<8xf32> to vector<8x1xf32>
      %c0_31 = arith.constant 0 : index
      %c0_32 = arith.constant 0 : index
      %48 = vector.load %arg3[%c0_31, %c0_32] : memref<8x1xi32, #tpu.memory_space<vmem>>, vector<8x1xi32>
      %c0_33 = arith.constant 0 : index
      %c0_34 = arith.constant 0 : index
      %49 = vector.load %arg4[%c0_33, %c0_34] : memref<1x8xi32, #tpu.memory_space<vmem>>, vector<1x8xi32>
      %50 = vector.broadcast %48 : vector<8x1xi32> to vector<8x8xi32>
      %51 = vector.broadcast %49 : vector<1x8xi32> to vector<8x8xi32>
      %52 = arith.cmpi eq, %50, %51 : vector<8x8xi32>
      %cst_35 = arith.constant dense<true> : vector<8x8xi1>
      %53 = arith.xori %25, %cst_35 : vector<8x8xi1>
      %54 = arith.andi %52, %53 : vector<8x8xi1>
      %cst_36 = arith.constant 0.000000e+00 : f32
      %55 = vector.broadcast %cst_36 : f32 to vector<8x8xf32>
      %56 = arith.select %54, %45, %55 : vector<8x8xi1>, vector<8x8xf32>
      %cst_37 = arith.constant dense<0.000000e+00> : vector<8xf32>
      %57 = vector.multi_reduction <add>, %56, %cst_37 [1] : vector<8x8xf32> to vector<8xf32>
      %58 = vector.shape_cast %57 : vector<8xf32> to vector<8x1xf32>
      %59 = math.log %47 : vector<8x1xf32>
      %60 = math.log %58 : vector<8x1xf32>
      %61 = arith.subf %59, %60 : vector<8x1xf32>
      %62 = vector.shape_cast %61 : vector<8x1xf32> to vector<1x8x1xf32>
      %cst_38 = arith.constant dense<0.000000e+00> : vector<1xf32>
      %63 = vector.multi_reduction <add>, %62, %cst_38 [1, 2] : vector<1x8x1xf32> to vector<1xf32>
      %64 = vector.shape_cast %63 : vector<1xf32> to vector<1x1x1xf32>
      %65 = vector.extract %64[0, 0, 0] : f32 from vector<1x1x1xf32>
      %cst_39 = arith.constant 2.000000e+02 : f32
      %66 = arith.divf %65, %cst_39 : f32
      %c0_40 = arith.constant 0 : index
      %c0_41 = arith.constant 0 : index
      %67 = vector.load %arg2[%c0_40, %c0_41] : memref<8x256xf32, #tpu.memory_space<vmem>>, vector<8x256xf32>
      %cst_42 = arith.constant dense<0.000000e+00> : vector<256xf32>
      %68 = vector.multi_reduction <add>, %67, %cst_42 [0] : vector<8x256xf32> to vector<256xf32>
      %69 = vector.shape_cast %68 : vector<256xf32> to vector<1x256xf32>
      %cst_43 = arith.constant 8.000000e+00 : f32
      %70 = vector.broadcast %cst_43 : f32 to vector<1x256xf32>
      %71 = arith.divf %69, %70 : vector<1x256xf32>
      %72 = math.log %71 : vector<1x256xf32>
      %73 = vector.shape_cast %72 : vector<1x256xf32> to vector<1x1x256xf32>
      %cst_44 = arith.constant dense<0.000000e+00> : vector<1xf32>
      %74 = vector.multi_reduction <add>, %73, %cst_44 [1, 2] : vector<1x1x256xf32> to vector<1xf32>
      %75 = vector.shape_cast %74 : vector<1xf32> to vector<1x1x1xf32>
      %76 = vector.extract %75[0, 0, 0] : f32 from vector<1x1x1xf32>
      %cst_45 = arith.constant 2.560000e+02 : f32
      %77 = arith.divf %76, %cst_45 : f32
      %78 = vector.shape_cast %71 : vector<1x256xf32> to vector<1x1x256xf32>
      %cst_46 = arith.constant dense<0.000000e+00> : vector<1xf32>
      %79 = vector.multi_reduction <add>, %78, %cst_46 [1, 2] : vector<1x1x256xf32> to vector<1xf32>
      %80 = vector.shape_cast %79 : vector<1xf32> to vector<1x1x1xf32>
      %81 = vector.extract %80[0, 0, 0] : f32 from vector<1x1x1xf32>
      %cst_47 = arith.constant 2.560000e+02 : f32
      %82 = arith.divf %81, %cst_47 : f32
      %83 = math.log %82 : f32
      %84 = arith.subf %77, %83 : f32
      %c0_48 = arith.constant 0 : index
      %c0_49 = arith.constant 0 : index
      %85 = memref.load %arg1[%c0_48, %c0_49] : memref<1x1xf32, #tpu.memory_space<smem>>
      %cst_50 = arith.constant 0.000000e+00 : f32
      %cst_51 = arith.constant 1.000000e+02 : f32
      %86 = arith.maximumf %cst_50, %84 : f32
      %87 = arith.minimumf %cst_51, %86 : f32
      %88 = arith.mulf %85, %87 : f32
      %89 = arith.addf %88, %66 : f32
      %c0_52 = arith.constant 0 : index
      %c0_53 = arith.constant 0 : index
      %90 = memref.load %arg6[%c0_52, %c0_53] : memref<1x1xf32, #tpu.memory_space<smem>>
      memref.store %89, %arg6[%c0_52, %c0_53] : memref<1x1xf32, #tpu.memory_space<smem>>
    } else {
    }
    return
  }
  func.func @transform_0(%arg0: i32) -> (i32, i32) {
    %c0_i32 = arith.constant 0 : i32
    %c0_i32_0 = arith.constant 0 : i32
    %c0_i32_1 = arith.constant 0 : i32
    return %c0_i32, %c0_i32_0 : i32, i32
  }
  func.func @transform_1(%arg0: i32) -> (i32, i32) {
    %c0_i32 = arith.constant 0 : i32
    %c0_i32_0 = arith.constant 0 : i32
    %c0_i32_1 = arith.constant 0 : i32
    return %c0_i32, %c0_i32_0 : i32, i32
  }
  func.func @transform_2(%arg0: i32) -> (i32, i32) {
    %c0_i32 = arith.constant 0 : i32
    %c0_i32_0 = arith.constant 0 : i32
    %c0_i32_1 = arith.constant 0 : i32
    return %c0_i32, %c0_i32_0 : i32, i32
  }
  func.func @transform_3(%arg0: i32) -> (i32, i32) {
    %c0_i32 = arith.constant 0 : i32
    %c0_i32_0 = arith.constant 0 : i32
    %c0_i32_1 = arith.constant 0 : i32
    return %c0_i32, %c0_i32_0 : i32, i32
  }
  func.func @transform_4(%arg0: i32) -> (i32, i32) {
    %c0_i32 = arith.constant 0 : i32
    %c0_i32_0 = arith.constant 0 : i32
    return %c0_i32, %arg0 : i32, i32
  }
  func.func @transform_5(%arg0: i32) -> (i32, i32) {
    %c0_i32 = arith.constant 0 : i32
    %c0_i32_0 = arith.constant 0 : i32
    %c0_i32_1 = arith.constant 0 : i32
    return %c0_i32, %c0_i32_0 : i32, i32
  }
}

</mosaic_0001>

<llo_original>
// kernel: tpu_custom_call.1
$region0: #{tpu_custom_call.1}
  #allocation0 [shape = 'u32[]', space=smem, size = 0x4, offset = 0x4, fixed_abs, tag = 'smem constant byte address 0x4 - core index']
  #allocation1 [shape = 'u32[144,128]{1,0:T(1,128)}', space=vmem, size = 0x12000, scoped, tag = 'internal scratch']
  #allocation2 [shape = 'f32[8,8]{1,0:T(8,128)}', space=vmem, size = 0x1000, scoped, tag = 'scratch operand']
  #allocation3 [shape = 'f32[8,1]{1,0:T(8,128)}', space=vmem, size = 0x1000, scoped, tag = 'scratch operand']
  #allocation4 [shape = 'f32[1,8]{1,0:T(1,128)}', space=vmem, size = 0x200, scoped, tag = 'scratch operand']
  #allocation5 [shape = 'f32[1,1]{1,0:T(1,128)S(6)}', space=smem, size = 0x200, scoped, tag = 'scoped memory for tpu_custom_call.1']
  %s0 = inlined_call_operand.<no memory space> [shape: f32[1,1], index: 0, kind: input, shape index: {}]
  %s1 = inlined_call_operand.hbm [shape: f32[8,256], index: 1, kind: input, shape index: {}]
  %s2 = inlined_call_operand.vmem [shape: s32[8,1], index: 2, kind: input, shape index: {}]
  %s3 = inlined_call_operand.vmem [shape: s32[1,8], index: 3, kind: input, shape index: {}]
  %s4 = inlined_call_operand.vmem [shape: f32[8,256], index: 4, kind: input, shape index: {}]
  %s5 = inlined_call_operand.hbm [shape: f32[1,1], index: 5, kind: output, shape index: {}]
  %s6 = sld [smem:[#allocation0]]
  $region42: #{tpu_custom_call.1} parent=0
    _
  %s8 = ssub.s32 1, %s6
  %s9 = scalar_select 0, %s8, %s6
  %10 = sst [smem:[#allocation5]] %s0
  $region1: #{tpu_custom_call.1} parent=0
    #allocation6 [shape = 'u8[8192]{0}', space=vmem, size = 0x2000, scoped, tag = 'input window, operand 1, single buffered']
    #allocation7 [shape = 's32[1]{0}', space=sflag, size = 0x4, scoped, tag = 'scoped memory for tpu_custom_call.1']
    #allocation8 [shape = 's32[1]{0}', space=sflag, size = 0x4, scoped, tag = 'scoped memory for tpu_custom_call.1']
    #allocation9 [shape = 'u8[512]{0}', space=smem, size = 0x200, scoped, tag = 'output window, operand 0, single buffered']
    %11 = vsyncpa [#allocation7], 0
    %12 = vsyncpa [#allocation8], 0
    // Predicated region
    $region2: #{tpu_custom_call.1} parent=1 // pred_check
      _
    $region3: #{tpu_custom_call.1} parent=1 // pred_check_branch
      %14 = sbr.rel (0) target = $region5
    $region4: #{tpu_custom_call.1} parent=1 // pred_region
      _
    $region5: #{tpu_custom_call.1} parent=1 // pred_fallthru
      _
    // Predicated region
    $region6: #{tpu_custom_call.1} parent=1 // pred_check
      _
    $region7: #{tpu_custom_call.1} parent=1 // pred_check_branch
      %16 = sbr.rel (0) target = $region9
    $region8: #{tpu_custom_call.1} parent=1 // pred_region
      %s18 = ssub.s32 256, 256
      %19 = vsyncadd [#allocation7], %s18
      %s21 = sshll.u32 [#allocation6], 4
      %s22 = int_to_ptr.vmem [resolvable:$true] %s21
      %24 = dma.hbm_to_vmem [thread:$0]  %s1, 256, %s22, [#allocation7]
    $region9: #{tpu_custom_call.1} parent=1 // pred_fallthru
      _
    // Predicated region
    $region10: #{tpu_custom_call.1} parent=1 // pred_check
      _
    $region11: #{tpu_custom_call.1} parent=1 // pred_check_branch
      %26 = sbr.rel (0) target = $region13
    $region12: #{tpu_custom_call.1} parent=1 // pred_region
      _
    $region13: #{tpu_custom_call.1} parent=1 // pred_fallthru
      _
    // Predicated region
    $region14: #{tpu_custom_call.1} parent=1 // pred_check
      _
    $region15: #{tpu_custom_call.1} parent=1 // pred_check_branch
      %28 = sbr.rel (0) target = $region17
    $region16: #{tpu_custom_call.1} parent=1 // pred_region
      _
    $region17: #{tpu_custom_call.1} parent=1 // pred_fallthru
      _
    // Predicated region
    $region18: #{tpu_custom_call.1} parent=1 // pred_check
      _
    $region19: #{tpu_custom_call.1} parent=1 // pred_check_branch
      %30 = sbr.rel (0) target = $region21
    $region20: #{tpu_custom_call.1} parent=1 // pred_region
      _
    $region21: #{tpu_custom_call.1} parent=1 // pred_fallthru
      _
    // Predicated region
    $region22: #{tpu_custom_call.1} parent=1 // pred_check
      _
    $region23: #{tpu_custom_call.1} parent=1 // pred_check_branch
      %32 = sbr.rel (0) target = $region25
    $region24: #{tpu_custom_call.1} parent=1 // pred_region
      %33 = dma.done [#allocation7], 256
    $region25: #{tpu_custom_call.1} parent=1 // pred_fallthru
      _
    %p34 = scmp.eq.s32.totalorder 0, 0
    // Predicated region
    $region26: #{tpu_custom_call.1} parent=1 // pred_check
      %p35 = pneg %p34
    $region27: #{tpu_custom_call.1} parent=1 // pred_check_branch
      %37 = sbr.rel (%p35) target = $region29
    $region28: #{tpu_custom_call.1} parent=1 // pred_region
      %vm38 = vcmask 64512
      %39 = vst.msk [vmem:[#allocation2] sm:$0xff] %vm38, 0.0
      %vm40 = vcmask 7168
      %41 = vst.msk [vmem:[#allocation3] sm:$0xff] %vm40, 0.0
      %vm42 = vcmask 57344
      %43 = vst.msk [vmem:[#allocation4] sm:$0x1] %vm42, 0.0
    $region29: #{tpu_custom_call.1} parent=1 // pred_fallthru
      _
    %v44 = vld [vmem:[%s4] sm:$0xff]
    %v45 = vld [vmem:[%s4 + $0x8] sm:$0xff]
    %v46 = vld [vmem:[#allocation2] sm:$0xff]
    %47 = vmatprep.subr.mxu0 %v45
    %48 = vmatpush1.xpose.msra.mxu0 %v44
    %49 = vmatprep.subr.mxu0 0.0
    %50 = vmatpush1.xpose.msra.mxu0 0.0
    %51 = vmatprep.subr.mxu0 0.0
    %52 = vmatpush1.xpose.msra.mxu0 0.0
    %53 = vmatprep.subr.mxu0 0.0
    %54 = vmatpush1.xpose.msra.mxu0 0.0
    %55 = vmatprep.subr.mxu0 0.0
    %56 = vmatpush1.xpose.msra.mxu0 0.0
    %57 = vmatprep.subr.mxu0 0.0
    %58 = vmatpush1.xpose.msra.mxu0 0.0
    %59 = vmatprep.subr.mxu0 0.0
    %60 = vmatpush1.xpose.msra.mxu0 0.0
    %61 = vmatprep.subr.mxu0 0.0
    %62 = vmatpush1.xpose.msra.mxu0 0.0
    %63 = vmatprep.subr.mxu0 0.0
    %64 = vmatpush1.xpose.msra.mxu0 0.0
    %65 = vmatprep.subr.mxu0 0.0
    %66 = vmatpush1.xpose.msra.mxu0 0.0
    %67 = vmatprep.subr.mxu0 0.0
    %68 = vmatpush1.xpose.msra.mxu0 0.0
    %69 = vmatprep.subr.mxu0 0.0
    %70 = vmatpush1.xpose.msra.mxu0 0.0
    %71 = vmatprep.subr.mxu0 0.0
    %72 = vmatpush1.xpose.msra.mxu0 0.0
    %73 = vmatprep.subr.mxu0 0.0
    %74 = vmatpush1.xpose.msra.mxu0 0.0
    %75 = vmatprep.subr.mxu0 0.0
    %76 = vmatpush1.xpose.msra.mxu0 0.0
    %77 = vmatprep.subr.mxu0 0.0
    %78 = vmatpush1.xpose.msra.mxu0 0.0
    %79 = vmatprep.subr.mxu0 0.0
    %80 = vmatpush1.xpose.msra.mxu0 0.0
    %81 = vmatprep.subr.mxu0 0.0
    %82 = vmatpush1.xpose.msra.mxu0 0.0
    %83 = vmatprep.subr.mxu0 0.0
    %84 = vmatpush1.xpose.msra.mxu0 0.0
    %85 = vmatprep.subr.mxu0 0.0
    %86 = vmatpush1.xpose.msra.mxu0 0.0
    %87 = vmatprep.subr.mxu0 0.0
    %88 = vmatpush1.xpose.msra.mxu0 0.0
    %89 = vmatprep.subr.mxu0 0.0
    %90 = vmatpush1.xpose.msra.mxu0 0.0
    %91 = vmatprep.subr.mxu0 0.0
    %92 = vmatpush1.xpose.msra.mxu0 0.0
    %93 = vmatprep.subr.mxu0 0.0
    %94 = vmatpush1.xpose.msra.mxu0 0.0
    %95 = vmatprep.subr.mxu0 0.0
    %96 = vmatpush1.xpose.msra.mxu0 0.0
    %97 = vmatprep.subr.mxu0 0.0
    %98 = vmatpush1.xpose.msra.mxu0 0.0
    %99 = vmatprep.subr.mxu0 0.0
    %100 = vmatpush1.xpose.msra.mxu0 0.0
    %101 = vmatprep.subr.mxu0 0.0
    %102 = vmatpush1.xpose.msra.mxu0 0.0
    %103 = vmatprep.subr.mxu0 0.0
    %104 = vmatpush1.xpose.msra.mxu0 0.0
    %105 = vmatprep.subr.mxu0 0.0
    %106 = vmatpush1.xpose.msra.mxu0 0.0
    %107 = vmatprep.subr.mxu0 0.0
    %108 = vmatpush1.xpose.msra.mxu0 0.0
    %109 = vmatprep.subr.mxu0 0.0
    %110 = vmatpush1.xpose.msra.mxu0 0.0
    %111 = vmatprep.mubr.f32.mxu0 %v45
    %112 = vmatmul.mubr.f32.gmra.mrb[0].mxu0 %v44
    %v113 = vpop.f32.mrb[0].mxu0
    %v114 = vadd.f32 0.0, %v113
    %v115 = vpop.f32.mrb[0].mxu0
    %116 = vdwg.mxu0
    %v117 = vadd.f32 %v46, %v114
    %vm118 = vcmask 64512
    %119 = vst.msk [vmem:[#allocation2] sm:$0xff] %vm118, %v117
    %v120 = vmul.f32 %v44, %v44
    %v121 = vmul.f32 %v45, %v45
    %v122 = vld [vmem:[#allocation3] sm:$0xff]
    %v123 = vadd.f32 %v120, %v121
    %124 = vadd.xlane.f32.xlu0 %v123
    %v125 = vpop.xlane.xlu0 %124
    %v126 = vadd.f32 %v122, %v125
    %vm127 = vcmask 7168
    %128 = vst.msk [vmem:[#allocation3] sm:$0xff] %vm127, %v126
    %v129 = vld [vmem:[#allocation4] sm:$0x1]
    %130 = vmatprep.subr.mxu0 %v121
    %131 = vmatpush1.xpose.msra.mxu0 %v120
    %132 = vmatprep.subr.mxu0 0.0
    %133 = vmatpush1.xpose.msra.mxu0 0.0
    %134 = vmatprep.subr.mxu0 0.0
    %135 = vmatpush1.xpose.msra.mxu0 0.0
    %136 = vmatprep.subr.mxu0 0.0
    %137 = vmatpush1.xpose.msra.mxu0 0.0
    %138 = vmatprep.subr.mxu0 0.0
    %139 = vmatpush1.xpose.msra.mxu0 0.0
    %140 = vmatprep.subr.mxu0 0.0
    %141 = vmatpush1.xpose.msra.mxu0 0.0
    %142 = vmatprep.subr.mxu0 0.0
    %143 = vmatpush1.xpose.msra.mxu0 0.0
    %144 = vmatprep.subr.mxu0 0.0
    %145 = vmatpush1.xpose.msra.mxu0 0.0
    %146 = vmatprep.subr.mxu0 0.0
    %147 = vmatpush1.xpose.msra.mxu0 0.0
    %148 = vmatprep.subr.mxu0 0.0
    %149 = vmatpush1.xpose.msra.mxu0 0.0
    %150 = vmatprep.subr.mxu0 0.0
    %151 = vmatpush1.xpose.msra.mxu0 0.0
    %152 = vmatprep.subr.mxu0 0.0
    %153 = vmatpush1.xpose.msra.mxu0 0.0
    %154 = vmatprep.subr.mxu0 0.0
    %155 = vmatpush1.xpose.msra.mxu0 0.0
    %156 = vmatprep.subr.mxu0 0.0
    %157 = vmatpush1.xpose.msra.mxu0 0.0
    %158 = vmatprep.subr.mxu0 0.0
    %159 = vmatpush1.xpose.msra.mxu0 0.0
    %160 = vmatprep.subr.mxu0 0.0
    %161 = vmatpush1.xpose.msra.mxu0 0.0
    %162 = vmatprep.subr.mxu0 0.0
    %163 = vmatpush1.xpose.msra.mxu0 0.0
    %164 = vmatprep.subr.mxu0 0.0
    %165 = vmatpush1.xpose.msra.mxu0 0.0
    %166 = vmatprep.subr.mxu0 0.0
    %167 = vmatpush1.xpose.msra.mxu0 0.0
    %168 = vmatprep.subr.mxu0 0.0
    %169 = vmatpush1.xpose.msra.mxu0 0.0
    %170 = vmatprep.subr.mxu0 0.0
    %171 = vmatpush1.xpose.msra.mxu0 0.0
    %172 = vmatprep.subr.mxu0 0.0
    %173 = vmatpush1.xpose.msra.mxu0 0.0
    %174 = vmatprep.subr.mxu0 0.0
    %175 = vmatpush1.xpose.msra.mxu0 0.0
    %176 = vmatprep.subr.mxu0 0.0
    %177 = vmatpush1.xpose.msra.mxu0 0.0
    %178 = vmatprep.subr.mxu0 0.0
    %179 = vmatpush1.xpose.msra.mxu0 0.0
    %180 = vmatprep.subr.mxu0 0.0
    %181 = vmatpush1.xpose.msra.mxu0 0.0
    %182 = vmatprep.subr.mxu0 0.0
    %183 = vmatpush1.xpose.msra.mxu0 0.0
    %184 = vmatprep.subr.mxu0 0.0
    %185 = vmatpush1.xpose.msra.mxu0 0.0
    %186 = vmatprep.subr.mxu0 0.0
    %187 = vmatpush1.xpose.msra.mxu0 0.0
    %188 = vmatprep.subr.mxu0 0.0
    %189 = vmatpush1.xpose.msra.mxu0 0.0
    %190 = vmatprep.subr.mxu0 0.0
    %191 = vmatpush1.xpose.msra.mxu0 0.0
    %192 = vmatprep.subr.mxu0 0.0
    %193 = vmatpush1.xpose.msra.mxu0 0.0
    %194 = vmatprep.mubr.f32.mxu0 1.0
    %195 = vmatmul.mubr.f32.gmra.mrb[0].mxu0 1.0
    %v196 = vpop.f32.mrb[0].mxu0
    %v197 = vadd.f32 0.0, %v196
    %v198 = vpop.f32.mrb[0].mxu0
    %199 = vdwg.mxu0
    %v200 = vadd.f32 %v129, %v197
    %vm201 = vcmask 57344
    %202 = vst.msk [vmem:[#allocation4] sm:$0x1] %vm201, %v200
    // Predicated region
    $region30: #{tpu_custom_call.1} parent=1 // pred_check
      %p203 = pneg %p34
    $region31: #{tpu_custom_call.1} parent=1 // pred_check_branch
      %205 = sbr.rel (%p203) target = $region33
    $region32: #{tpu_custom_call.1} parent=1 // pred_region
      %v206 = vld [vmem:[#allocation2] sm:$0xff]
      %v207 = vlaneseq
      %v208 = vshrl.u32 %v207, 7
      %v209 = vlaneseq
      %v210 = vand.u32 %v209, 127
      %vm211 = vcmp.eq.s32.totalorder %v208, %v210
      %v212 = vld [vmem:[#allocation3] sm:$0xff]
      %v213 = vld [vmem:[#allocation4] sm:$0x1]
      %215 = vset.pattern.permute.xlu0 0
      %216 = vperm.xlu0 %215, %v212
      %v217 = vpop.permute.xlu0 %216
      %v220 = vlaneseq
      %v221 = vshrl.u32 %v220, 7
      %v222 = vsub.s32 0, %v221
      %v223 = vrot.slane %v213, %v222
      %v225 = vadd.f32 %v217, %v223
      %v226 = vmul.f32 %v206, 2.0
      %v227 = vsub.f32 %v225, %v226
      %v228 = vmax.f32 %v227, 0.0
      %v229 = vrsqrt.pop %v228
      %v230 = vmul.f32 %v228, %v229
      %vm231 = vcmp.eq.f32.partialorder %v228, inf
      %v232 = vsel %vm231, %v228, %v230
      %vm233 = vcmp.eq.f32.partialorder %v228, 0.0
      %v234 = vand.u32 %v228, 2147483648
      %v235 = vsel %vm233, %v234, %v232
      %v236 = vsub.f32 0.0, %v235
      %v237 = vsel %vm211, -inf, %v236
      %v238 = vsel %vm118, %v237, -inf
      %239 = vmax.xlane.f32.xlu0 %v238
      %v240 = vpop.xlane.xlu0 %239
      %v241 = vsub.f32 %v237, %v240
      %v242 = vmul.f32 %v241, 1.442695
      %v243 = vpow.pop %v242
      %v244 = vsel %vm118, %v243, 0.0
      %245 = vadd.xlane.f32.xlu0 %v244
      %v246 = vpop.xlane.xlu0 %245
      %v247 = vld [vmem:[%s2] sm:$0xff]
      %v248 = vld [vmem:[%s3] sm:$0x1]
      %249 = vset.pattern.permute.xlu0 0
      %250 = vperm.xlu0 %249, %v247
      %v251 = vpop.permute.xlu0 %250
      %v252 = vlaneseq
      %v253 = vshrl.u32 %v252, 7
      %v254 = vsub.s32 0, %v253
      %v255 = vrot.slane %v248, %v254
      %vm256 = vcmp.eq.s32.totalorder %v251, %v255
      %vm257 = vmxor %vm211, 1
      %vm258 = vmand %vm256, %vm257
      %v259 = vsel %vm258, %v243, 0.0
      %v260 = vsel %vm118, %v259, 0.0
      %261 = vadd.xlane.f32.xlu0 %v260
      %v262 = vpop.xlane.xlu0 %261
      %v263 = vlog2.pop %v246
      %v264 = vmul.f32 %v263, 0.6931472
      %v265 = vlog2.pop %v262
      %v266 = vmul.f32 %v265, 0.6931472
      %v267 = vsub.f32 %v264, %v266
      %v268 = vsel %vm127, %v267, 0.0
      %269 = vadd.xlane.f32.xlu0 %v268
      %v270 = vpop.xlane.xlu0 %269
      %v271 = vrot.slane %v270, 4
      %v272 = vadd.f32 %v270, %v271
      %v273 = vrot.slane %v272, 2
      %v274 = vadd.f32 %v272, %v273
      %v275 = vrot.slane %v274, 1
      %v276 = vadd.f32 %v274, %v275
      %s277 = vtos %v276
      %v278 = vrcp.pop 200.0
      %s279 = vtos %v278
      %s280 = smul.f32 %s277, %s279
      %v281 = vld [vmem:[#allocation6] sm:$0xff]
      %v282 = vld [vmem:[#allocation6 + $0x8] sm:$0xff]
      %v283 = vrot.slane %v281, 4
      %v284 = vadd.f32 %v281, %v283
      %v285 = vrot.slane %v284, 2
      %v286 = vadd.f32 %v284, %v285
      %v287 = vrot.slane %v286, 1
      %v288 = vadd.f32 %v286, %v287
      %v289 = vrot.slane %v282, 4
      %v290 = vadd.f32 %v282, %v289
      %v291 = vrot.slane %v290, 2
      %v292 = vadd.f32 %v290, %v291
      %v293 = vrot.slane %v292, 1
      %v294 = vadd.f32 %v292, %v293
      %v295 = vrcp.pop 8.0
      %v296 = vmul.f32 %v288, %v295
      %v297 = vmul.f32 %v294, %v295
      %v298 = vlog2.pop %v296
      %v299 = vmul.f32 %v298, 0.6931472
      %v300 = vlog2.pop %v297
      %v301 = vmul.f32 %v300, 0.6931472
      %vm302 = vcmask 1040384
      %v303 = vsel %vm302, %v299, 0.0
      %v304 = vsel %vm302, %v301, 0.0
      %v305 = vadd.f32 %v303, %v304
      %306 = vadd.xlane.f32.xlu0 %v305
      %v307 = vpop.xlane.xlu0 %306
      %v308 = vrot.slane %v307, 4
      %v309 = vadd.f32 %v307, %v308
      %v310 = vrot.slane %v309, 2
      %v311 = vadd.f32 %v309, %v310
      %v312 = vrot.slane %v311, 1
      %v313 = vadd.f32 %v311, %v312
      %s314 = vtos %v313
      %v315 = vrcp.pop 256.0
      %s316 = vtos %v315
      %s317 = smul.f32 %s314, %s316
      %v318 = vsel %vm302, %v296, 0.0
      %v319 = vsel %vm302, %v297, 0.0
      %v320 = vadd.f32 %v318, %v319
      %321 = vadd.xlane.f32.xlu0 %v320
      %v322 = vpop.xlane.xlu0 %321
      %v323 = vrot.slane %v322, 4
      %v324 = vadd.f32 %v322, %v323
      %v325 = vrot.slane %v324, 2
      %v326 = vadd.f32 %v324, %v325
      %v327 = vrot.slane %v326, 1
      %v328 = vadd.f32 %v326, %v327
      %s329 = vtos %v328
      %v330 = vrcp.pop 256.0
      %s331 = vtos %v330
      %s332 = smul.f32 %s329, %s331
      %v333 = vstv %s332
      %v334 = vlog2.pop %v333
      %v335 = vmul.f32 %v334, 0.6931472
      %s336 = vtos %v335
      %s337 = ssub.f32 %s317, %s336
      %s338 = sld [smem:[#allocation5]]
      %s339 = smax.f32 %s337, 0.0
      %s340 = smin.f32 %s339, 100.0
      %s341 = smul.f32 %s338, %s340
      %s342 = sadd.f32 %s341, %s280
      %s343 = scalar_lea.smem [#allocation9], 0
      %344 = sst [smem:[%s343]] %s342
    $region33: #{tpu_custom_call.1} parent=1 // pred_fallthru
      _
    // Predicated region
    $region34: #{tpu_custom_call.1} parent=1 // pred_check
      _
    $region35: #{tpu_custom_call.1} parent=1 // pred_check_branch
      %346 = sbr.rel (0) target = $region37
    $region36: #{tpu_custom_call.1} parent=1 // pred_region
      %s348 = ssub.s32 16, 16
      %349 = vsyncadd [#allocation8], %s348
      %352 = dma.smem_to_hbm [#allocation9], 16, %s5, [#allocation8]
    $region37: #{tpu_custom_call.1} parent=1 // pred_fallthru
      _
    // Predicated region
    $region38: #{tpu_custom_call.1} parent=1 // pred_check
      _
    $region39: #{tpu_custom_call.1} parent=1 // pred_check_branch
      %354 = sbr.rel (0) target = $region41
    $region40: #{tpu_custom_call.1} parent=1 // pred_region
      %355 = dma.done [#allocation8], 16
    $region41: #{tpu_custom_call.1} parent=1 // pred_fallthru
      _
    %356 = sfence
    %357 = vsyncpa [#allocation7], 1
    %358 = vsyncpa [#allocation8], 1

</llo_original>
